<compile_context>
chip_gen: v6e
topology: v6e:2x2x1
jax: 0.10.0
libtpu: 0.0.40
codegen_flags: <defaults>
</compile_context>

<pallas_src>
import functools
import math

import jax
import jax.numpy as jnp
from jax.experimental import pallas as pl
from jax.experimental.pallas import tpu as pltpu


def _round_up(x: int, m: int) -> int:
    return ((x + m - 1) // m) * m


def _largest_divisor_tile(size: int, candidates) -> int:
    for c in candidates:
        if size % c == 0:
            return c
    return size


def _linear_kernel(x_ref, w_ref, b_ref, o_ref, *, k_axis):
    """Computes one (tm, tn) output tile, accumulating over the K grid axis
    directly into the resident f32 output ref (its index map ignores k)."""
    k = pl.program_id(k_axis)

    @pl.when(k == 0)
    def _():
        # Initialize the resident output tile with the broadcast bias.
        o_ref[...] = jnp.broadcast_to(b_ref[...], o_ref.shape)

    # (tm, tk) @ (tk, tn) -> MXU, standard layout, no transpose needed.
    o_ref[...] += jnp.dot(
        x_ref[...], w_ref[...], preferred_element_type=jnp.float32
    )


def prepare_linear_params(weight, bias):
    """One-time parameter prep (do this at model-init time, NOT per forward call):
      * transpose the PyTorch-layout (out_features, in_features) weight to (K, N),
      * zero-pad K and N up to multiples of 128 (lane/sublane alignment).
    Returns (w_kn_padded, bias_row_padded, out_features).
    """
    N, K = weight.shape
    Kp = _round_up(K, 128)
    Np = _round_up(N, 128)
    w_kn = jnp.pad(weight.T.astype(jnp.float32), ((0, Kp - K), (0, Np - N)))
    b_row = jnp.pad(bias.astype(jnp.float32), (0, Np - N)).reshape(1, Np)
    return w_kn, b_row, N


@functools.partial(jax.jit, static_argnums=(3,))
def linear_forward(x, w_kn, b_row, out_features):
    """y = x @ weight.T + bias with pre-prepared (K, N)-layout padded params."""
    B, K = x.shape
    Kp, Np = w_kn.shape

    # ---------------- tile selection (shape-adaptive) ----------------
    # N tile: as large as possible (<= 512), preferring 256-multiples for the MXU.
    tn = Np if Np <= 512 else _largest_divisor_tile(Np, (512, 256, 128))
    # K tile: big DMAs toward the HBM roofline.
    tk = Kp if Kp <= 2048 else _largest_divisor_tile(Kp, (2048, 1024, 512, 256, 128))

    Mp_small = _round_up(B, 8)
    small_batch = Mp_small <= 512
    if small_batch:
        tm = Mp = Mp_small          # whole (padded) batch resident; no M grid axis
    else:
        tm = 512
        Mp = _round_up(B, tm)

    # VMEM footprint guard: double-buffered x / w / bias tiles + resident output.
    # Keeps us safely under v7x's 64 MiB (and the 48 MiB scoped limit below).
    def _footprint(tk_):
        return 4 * (2 * tm * tk_ + 2 * tk_ * tn + 2 * tn + 2 * tm * tn)

    while _footprint(tk) > (40 << 20) and tk > 128:
        tk = max(128, tk // 2)

    xp = jnp.pad(x.astype(jnp.float32), ((0, Mp - B), (0, Kp - K)))

    gm, gn, gk = Mp // tm, Np // tn, Kp // tk

    # Honest bytes: x is re-read gn times, the weight gm times (once in the
    # small-batch path), the output written once.
    cost = pl.CostEstimate(
        flops=2 * Mp * Kp * Np,
        transcendentals=0,
        bytes_accessed=4 * (Mp * Kp * gn + Kp * Np * gm + Mp * Np + Np * gm),
    )

    if small_batch:
        grid = (gn, gk)
        in_specs = [
            pl.BlockSpec((tm, tk), lambda j, k: (0, k)),   # x tile (whole batch)
            pl.BlockSpec((tk, tn), lambda j, k: (k, j)),   # weight tile (K, N)
            pl.BlockSpec((1, tn), lambda j, k: (0, j)),    # bias tile
        ]
        out_spec = pl.BlockSpec((tm, tn), lambda j, k: (0, j))
        dim_sem = ("parallel", "arbitrary")
        k_axis = 1
    else:
        grid = (gm, gn, gk)
        in_specs = [
            pl.BlockSpec((tm, tk), lambda i, j, k: (i, k)),
            pl.BlockSpec((tk, tn), lambda i, j, k: (k, j)),
            pl.BlockSpec((1, tn), lambda i, j, k: (0, j)),
        ]
        out_spec = pl.BlockSpec((tm, tn), lambda i, j, k: (i, j))
        dim_sem = ("parallel", "parallel", "arbitrary")
        k_axis = 2

    out_p = pl.pallas_call(
        functools.partial(_linear_kernel, k_axis=k_axis),
        out_shape=jax.ShapeDtypeStruct((Mp, Np), jnp.float32),
        grid_spec=pltpu.PrefetchScalarGridSpec(
            num_scalar_prefetch=0,
            grid=grid,
            in_specs=in_specs,
            out_specs=out_spec,
        ),
        compiler_params=pltpu.CompilerParams(
            dimension_semantics=dim_sem,
            vmem_limit_bytes=48 * 1024 * 1024,   # safe on v5e/v6e (128 MiB) and v7x (64 MiB)
        ),
        cost_estimate=cost,
    )(xp, w_kn, b_row)

    return out_p[:B, :out_features]


if __name__ == "__main__":
    # Small shapes consistent with the module: batch=8, in_features=32, out_features=16
    B, in_features, out_features = 8, 32, 16

    key = jax.random.PRNGKey(0)
    kx, kw, kb = jax.random.split(key, 3)

    # Deterministic PyTorch-like init: U(-1/sqrt(in), 1/sqrt(in))
    bound = 1.0 / math.sqrt(in_features)
    weight = jax.random.uniform(
        kw, (out_features, in_features), jnp.float32, -bound, bound
    )
    bias = jax.random.uniform(kb, (out_features,), jnp.float32, -bound, bound)
    x = jax.random.normal(kx, (B, in_features), jnp.float32)

    # One-time parameter prep (pad + transpose) -- model-init cost, not per call.
    w_kn, b_row, n_out = prepare_linear_params(weight, bias)

    y = linear_forward(x, w_kn, b_row, n_out)
    y = jax.block_until_ready(y)

    # Reference check against plain JAX (same semantics as nn.Linear forward).
    y_ref = x @ weight.T + bias
    assert y.shape == (B, out_features)
    assert jnp.allclose(y, y_ref, atol=1e-5, rtol=1e-5)

    print("KERNEL_OK")
</pallas_src>

<mosaic_0001>
module attributes {stable_mosaic.version = 11 : i64} {
  func.func @_linear_kernel(%arg0: i32, %arg1: i32, %arg2: memref<8x128xf32, #tpu.memory_space<vmem>>, %arg3: memref<128x128xf32, #tpu.memory_space<vmem>>, %arg4: memref<1x128xf32, #tpu.memory_space<vmem>>, %arg5: memref<8x128xf32, #tpu.memory_space<vmem>>) attributes {dimension_semantics = [#tpu.dimension_semantics<parallel>, #tpu.dimension_semantics<arbitrary>], iteration_bounds = array<i64: 1, 1>, scalar_prefetch = 0 : i64, scratch_operands = 0 : i64, tpu.core_type = #tpu.core_type<tc>, window_params = [{transform_indices = @transform_0, window_bounds = array<i64: 8, 128>}, {transform_indices = @transform_1, window_bounds = array<i64: 128, 128>}, {transform_indices = @transform_2, window_bounds = array<i64: 1, 128>}, {transform_indices = @transform_3, window_bounds = array<i64: 8, 128>}]} {
    %c0_i32 = arith.constant 0 : i32
    %0 = arith.cmpi eq, %arg1, %c0_i32 : i32
    %1 = arith.extui %0 : i1 to i32
    %c0_i32_0 = arith.constant 0 : i32
    %2 = arith.cmpi ne, %1, %c0_i32_0 : i32
    scf.if %2 {
      %c0_8 = arith.constant 0 : index
      %c0_9 = arith.constant 0 : index
      %9 = vector.load %arg4[%c0_8, %c0_9] : memref<1x128xf32, #tpu.memory_space<vmem>>, vector<1x128xf32>
      %10 = vector.shape_cast %9 : vector<1x128xf32> to vector<1x128xf32>
      %11 = vector.broadcast %10 : vector<1x128xf32> to vector<8x128xf32>
      %c0_10 = arith.constant 0 : index
      %c0_11 = arith.constant 0 : index
      %12 = vector.load %arg5[%c0_10, %c0_11] : memref<8x128xf32, #tpu.memory_space<vmem>>, vector<8x128xf32>
      tpu.vector_store %arg5[%c0_10, %c0_11], %11 {strides = array<i32>} : memref<8x128xf32, #tpu.memory_space<vmem>>, vector<8x128xf32>,
    } else {
    }
    %c0 = arith.constant 0 : index
    %c0_1 = arith.constant 0 : index
    %3 = vector.load %arg5[%c0, %c0_1] : memref<8x128xf32, #tpu.memory_space<vmem>>, vector<8x128xf32>
    %c0_2 = arith.constant 0 : index
    %c0_3 = arith.constant 0 : index
    %4 = vector.load %arg2[%c0_2, %c0_3] : memref<8x128xf32, #tpu.memory_space<vmem>>, vector<8x128xf32>
    %c0_4 = arith.constant 0 : index
    %c0_5 = arith.constant 0 : index
    %5 = vector.load %arg3[%c0_4, %c0_5] : memref<128x128xf32, #tpu.memory_space<vmem>>, vector<128x128xf32>
    %cst = arith.constant dense<0.000000e+00> : vector<8x128xf32>
    %6 = tpu.matmul %4, %5, %cst {dimension_numbers = #tpu.dot_dimension_numbers<[1], [0], [0], [1], [0, 0, 1, 1], [], []>} : vector<8x128xf32>, vector<128x128xf32>, vector<8x128xf32> -> vector<8x128xf32>
    %7 = arith.addf %3, %6 : vector<8x128xf32>
    %c0_6 = arith.constant 0 : index
    %c0_7 = arith.constant 0 : index
    %8 = vector.load %arg5[%c0_6, %c0_7] : memref<8x128xf32, #tpu.memory_space<vmem>>, vector<8x128xf32>
    tpu.vector_store %arg5[%c0_6, %c0_7], %7 {strides = array<i32>} : memref<8x128xf32, #tpu.memory_space<vmem>>, vector<8x128xf32>,
    return
  }
  func.func @transform_0(%arg0: i32, %arg1: i32) -> (i32, i32) {
    %c0_i32 = arith.constant 0 : i32
    %c0_i32_0 = arith.constant 0 : i32
    return %c0_i32, %arg1 : i32, i32
  }
  func.func @transform_1(%arg0: i32, %arg1: i32) -> (i32, i32) {
    %c0_i32 = arith.constant 0 : i32
    return %arg1, %arg0 : i32, i32
  }
  func.func @transform_2(%arg0: i32, %arg1: i32) -> (i32, i32) {
    %c0_i32 = arith.constant 0 : i32
    %c0_i32_0 = arith.constant 0 : i32
    return %c0_i32, %arg0 : i32, i32
  }
  func.func @transform_3(%arg0: i32, %arg1: i32) -> (i32, i32) {
    %c0_i32 = arith.constant 0 : i32
    %c0_i32_0 = arith.constant 0 : i32
    return %c0_i32, %arg0 : i32, i32
  }
}

</mosaic_0001>

<llo_original>
// kernel: linear_forward.1
$region0: #{linear_forward.1}
  #allocation0 [shape = 'u32[]', space=smem, size = 0x4, offset = 0x4, fixed_abs, tag = 'smem constant byte address 0x4 - core index']
  #allocation1 [shape = 'u32[144,128]{1,0:T(1,128)}', space=vmem, size = 0x12000, scoped, tag = 'internal scratch']
  %s0 = inlined_call_operand.vmem [shape: f32[8,128], index: 0, kind: input, shape index: {}]
  %s1 = inlined_call_operand.hbm [shape: f32[128,128], index: 1, kind: input, shape index: {}]
  %s2 = inlined_call_operand.vmem [shape: f32[1,128], index: 2, kind: input, shape index: {}]
  %s3 = inlined_call_operand.hbm [shape: f32[8,128], index: 3, kind: output, shape index: {}]
  %s4 = sld [smem:[#allocation0]]
  $region30: #{linear_forward.1} parent=0
    _
  %s6 = ssub.s32 1, %s4
  %s7 = scalar_select 0, %s6, %s4
  $region1: #{linear_forward.1} parent=0
    #allocation2 [shape = 'u8[65536]{0}', space=vmem, size = 0x10000, scoped, tag = 'input window, operand 1, single buffered']
    #allocation3 [shape = 's32[1]{0}', space=sflag, size = 0x4, scoped, tag = 'scoped memory for linear_forward.1']
    #allocation4 [shape = 's32[1]{0}', space=sflag, size = 0x4, scoped, tag = 'scoped memory for linear_forward.1']
    #allocation5 [shape = 'u8[4096]{0}', space=vmem, size = 0x1000, scoped, tag = 'output window, operand 0, single buffered']
    %8 = vsyncpa [#allocation3], 0
    %9 = vsyncpa [#allocation4], 0
    // Predicated region
    $region2: #{linear_forward.1} parent=1 // pred_check
      _
    $region3: #{linear_forward.1} parent=1 // pred_check_branch
      %11 = sbr.rel (0) target = $region5
    $region4: #{linear_forward.1} parent=1 // pred_region
      _
    $region5: #{linear_forward.1} parent=1 // pred_fallthru
      _
    // Predicated region
    $region6: #{linear_forward.1} parent=1 // pred_check
      _
    $region7: #{linear_forward.1} parent=1 // pred_check_branch
      %13 = sbr.rel (0) target = $region9
    $region8: #{linear_forward.1} parent=1 // pred_region
      %s15 = ssub.s32 2048, 2048
      %16 = vsyncadd [#allocation3], %s15
      %s17 = sshll.u32 [#allocation2], 4
      %s18 = int_to_ptr.vmem [resolvable:$true] %s17
      %23 = dma.hbm_to_vmem [thread:$0]  %s1, 2048, %s18, [#allocation3], 128, 128, 8
    $region9: #{linear_forward.1} parent=1 // pred_fallthru
      _
    // Predicated region
    $region10: #{linear_forward.1} parent=1 // pred_check
      _
    $region11: #{linear_forward.1} parent=1 // pred_check_branch
      %25 = sbr.rel (0) target = $region13
    $region12: #{linear_forward.1} parent=1 // pred_region
      _
    $region13: #{linear_forward.1} parent=1 // pred_fallthru
      _
    // Predicated region
    $region14: #{linear_forward.1} parent=1 // pred_check
      _
    $region15: #{linear_forward.1} parent=1 // pred_check_branch
      %27 = sbr.rel (0) target = $region17
    $region16: #{linear_forward.1} parent=1 // pred_region
      %28 = dma.done [#allocation3], 2048
    $region17: #{linear_forward.1} parent=1 // pred_fallthru
      _
    %p29 = scmp.eq.s32.totalorder 0, 0
    // Predicated region
    $region18: #{linear_forward.1} parent=1 // pred_check
      %p30 = pneg %p29
    $region19: #{linear_forward.1} parent=1 // pred_check_branch
      %32 = sbr.rel (%p30) target = $region21
    $region20: #{linear_forward.1} parent=1 // pred_region
      %v33 = vld [vmem:[%s2] sm:$0x1]
      %v35 = vlaneseq
      %v36 = vshrl.u32 %v35, 7
      %v37 = vsub.s32 0, %v36
      %v38 = vrot.slane %v33, %v37
      %40 = vst [vmem:[#allocation5] sm:$0xff] %v38
    $region21: #{linear_forward.1} parent=1 // pred_fallthru
      _
    %v41 = vld [vmem:[#allocation5] sm:$0xff]
    %v42 = vld [vmem:[%s0] sm:$0xff]
    %v43 = vld [vmem:[#allocation2] sm:$0xff]
    %v44 = vld [vmem:[#allocation2 + $0x8] sm:$0xff]
    %v45 = vld [vmem:[#allocation2 + $0x10] sm:$0xff]
    %v46 = vld [vmem:[#allocation2 + $0x18] sm:$0xff]
    %v47 = vld [vmem:[#allocation2 + $0x20] sm:$0xff]
    %v48 = vld [vmem:[#allocation2 + $0x28] sm:$0xff]
    %v49 = vld [vmem:[#allocation2 + $0x30] sm:$0xff]
    %v50 = vld [vmem:[#allocation2 + $0x38] sm:$0xff]
    %v51 = vld [vmem:[#allocation2 + $0x40] sm:$0xff]
    %v52 = vld [vmem:[#allocation2 + $0x48] sm:$0xff]
    %v53 = vld [vmem:[#allocation2 + $0x50] sm:$0xff]
    %v54 = vld [vmem:[#allocation2 + $0x58] sm:$0xff]
    %v55 = vld [vmem:[#allocation2 + $0x60] sm:$0xff]
    %v56 = vld [vmem:[#allocation2 + $0x68] sm:$0xff]
    %v57 = vld [vmem:[#allocation2 + $0x70] sm:$0xff]
    %v58 = vld [vmem:[#allocation2 + $0x78] sm:$0xff]
    %59 = vmatprep.subr.mxu0 0.0
    %60 = vmatpush1.msra.mxu0 %v58
    %61 = vmatprep.subr.mxu0 0.0
    %62 = vmatpush1.msra.mxu0 %v57
    %63 = vmatprep.subr.mxu0 0.0
    %64 = vmatpush1.msra.mxu0 %v56
    %65 = vmatprep.subr.mxu0 0.0
    %66 = vmatpush1.msra.mxu0 %v55
    %67 = vmatprep.subr.mxu0 0.0
    %68 = vmatpush1.msra.mxu0 %v54
    %69 = vmatprep.subr.mxu0 0.0
    %70 = vmatpush1.msra.mxu0 %v53
    %71 = vmatprep.subr.mxu0 0.0
    %72 = vmatpush1.msra.mxu0 %v52
    %73 = vmatprep.subr.mxu0 0.0
    %74 = vmatpush1.msra.mxu0 %v51
    %75 = vmatprep.subr.mxu0 0.0
    %76 = vmatpush1.msra.mxu0 %v50
    %77 = vmatprep.subr.mxu0 0.0
    %78 = vmatpush1.msra.mxu0 %v49
    %79 = vmatprep.subr.mxu0 0.0
    %80 = vmatpush1.msra.mxu0 %v48
    %81 = vmatprep.subr.mxu0 0.0
    %82 = vmatpush1.msra.mxu0 %v47
    %83 = vmatprep.subr.mxu0 0.0
    %84 = vmatpush1.msra.mxu0 %v46
    %85 = vmatprep.subr.mxu0 0.0
    %86 = vmatpush1.msra.mxu0 %v45
    %87 = vmatprep.subr.mxu0 0.0
    %88 = vmatpush1.msra.mxu0 %v44
    %89 = vmatprep.subr.mxu0 0.0
    %90 = vmatpush1.msra.mxu0 %v43
    %91 = vmatprep.subr.mxu0 0.0
    %92 = vmatpush2.msra.mxu0 0.0
    %93 = vmatprep.subr.mxu0 0.0
    %94 = vmatpush2.msra.mxu0 0.0
    %95 = vmatprep.subr.mxu0 0.0
    %96 = vmatpush2.msra.mxu0 0.0
    %97 = vmatprep.subr.mxu0 0.0
    %98 = vmatpush2.msra.mxu0 0.0
    %99 = vmatprep.subr.mxu0 0.0
    %100 = vmatpush2.msra.mxu0 0.0
    %101 = vmatprep.subr.mxu0 0.0
    %102 = vmatpush2.msra.mxu0 0.0
    %103 = vmatprep.subr.mxu0 0.0
    %104 = vmatpush2.msra.mxu0 0.0
    %105 = vmatprep.subr.mxu0 0.0
    %106 = vmatpush2.msra.mxu0 0.0
    %107 = vmatprep.subr.mxu0 0.0
    %108 = vmatpush2.msra.mxu0 0.0
    %109 = vmatprep.subr.mxu0 0.0
    %110 = vmatpush2.msra.mxu0 0.0
    %111 = vmatprep.subr.mxu0 0.0
    %112 = vmatpush2.msra.mxu0 0.0
    %113 = vmatprep.subr.mxu0 0.0
    %114 = vmatpush2.msra.mxu0 0.0
    %115 = vmatprep.subr.mxu0 0.0
    %116 = vmatpush2.msra.mxu0 0.0
    %117 = vmatprep.subr.mxu0 0.0
    %118 = vmatpush2.msra.mxu0 0.0
    %119 = vmatprep.subr.mxu0 0.0
    %120 = vmatpush2.msra.mxu0 0.0
    %121 = vmatprep.subr.mxu0 0.0
    %122 = vmatpush2.msra.mxu0 0.0
    %123 = vmatprep.mubr.f32.mxu0 0.0
    %124 = vmatmul.mubr.f32.gmra.mxu0 %v42
    %v125 = vpop.f32.mrf.mxu0
    %v126 = vadd.f32 0.0, %v125
    %v127 = vpop.f32.mrf.mxu0
    %128 = vdwg.mxu0
    %v129 = vadd.f32 %v41, %v126
    %130 = vst [vmem:[#allocation5] sm:$0xff] %v129
    // Predicated region
    $region22: #{linear_forward.1} parent=1 // pred_check
      _
    $region23: #{linear_forward.1} parent=1 // pred_check_branch
      %132 = sbr.rel (0) target = $region25
    $region24: #{linear_forward.1} parent=1 // pred_region
      %s134 = ssub.s32 128, 128
      %135 = vsyncadd [#allocation4], %s134
      %s137 = sshll.u32 [#allocation5], 4
      %s138 = int_to_ptr.vmem [resolvable:$true] %s137
      %140 = dma.vmem_to_hbm [thread:$0]  %s138, 128, %s3, [#allocation4]
    $region25: #{linear_forward.1} parent=1 // pred_fallthru
      _
    // Predicated region
    $region26: #{linear_forward.1} parent=1 // pred_check
      _
    $region27: #{linear_forward.1} parent=1 // pred_check_branch
      %142 = sbr.rel (0) target = $region29
    $region28: #{linear_forward.1} parent=1 // pred_region
      %143 = dma.done [#allocation4], 128
    $region29: #{linear_forward.1} parent=1 // pred_fallthru
      _
    %144 = vsyncpa [#allocation3], 1
    %145 = vsyncpa [#allocation4], 1

</llo_original>
